<compile_context>
chip_gen: v5e
topology: v5e:2x2
jax: 0.10.0
libtpu: 0.0.40
codegen_flags: <defaults>
</compile_context>

<pallas_src>
import functools

import jax
import jax.numpy as jnp
from jax.experimental import pallas as pl
from jax.experimental.pallas import tpu as pltpu


def _round_up(x, m):
    return (x + m - 1) // m * m


def _supcon_kernel(row_ids_ref, col_ids_ref, anchor_ref, contrast_t_ref,
                   loss_ref, m_ref, l_ref, psum_ref, pcnt_ref,
                   *, inv_temp, scale, tm, tc, n_contrast_valid):
    """One (TM x TC) tile of the anchor-vs-contrast score matrix.

    row_ids_ref:    (TM, 1)  int32   group id per anchor row
    col_ids_ref:    (1, TC)  int32   group id per contrast column
    anchor_ref:     (TM, D)  feature tile
    contrast_t_ref: (D, TC)  feature tile (pre-transposed in the wrapper)
    loss_ref:       (TM, 1)  f32     per-anchor loss (written on last col tile)
    m/l/psum/pcnt:  (TM, 1)  f32     VMEM scratch accumulators
    """
    col_t = pl.program_id(1)

    @pl.when(col_t == 0)
    def _init():
        m_ref[...] = jnp.full(m_ref.shape, -jnp.inf, dtype=jnp.float32)
        l_ref[...] = jnp.zeros(l_ref.shape, dtype=jnp.float32)
        psum_ref[...] = jnp.zeros(psum_ref.shape, dtype=jnp.float32)
        pcnt_ref[...] = jnp.zeros(pcnt_ref.shape, dtype=jnp.float32)

    # MXU: (TM, D) @ (D, TC) -> (TM, TC) scaled scores.
    s = jnp.dot(anchor_ref[...], contrast_t_ref[...],
                preferred_element_type=jnp.float32) * inv_temp

    # Masks built in-kernel (no N x N HBM traffic).
    gr = pl.program_id(0) * tm + jax.lax.broadcasted_iota(jnp.int32, (tm, tc), 0)
    gc = col_t * tc + jax.lax.broadcasted_iota(jnp.int32, (tm, tc), 1)
    valid_col = gc < n_contrast_valid             # exclude padded contrast cols
    not_diag = gr != gc                           # exclude self-contrast
    lmask = jnp.logical_and(not_diag, valid_col)  # denominator mask
    pmask = jnp.logical_and(row_ids_ref[...] == col_ids_ref[...], lmask)
    lmask_f = lmask.astype(jnp.float32)
    pmask_f = pmask.astype(jnp.float32)

    # Online log-sum-exp over contrast tiles (row max over valid columns only;
    # the max cancels analytically, it is purely for numerical stability).
    m_prev = m_ref[...]
    tile_max = jnp.max(jnp.where(valid_col, s, -jnp.inf), axis=1, keepdims=True)
    m_new = jnp.maximum(m_prev, tile_max)
    alpha = jnp.exp(m_prev - m_new)
    p = jnp.exp(s - m_new) * lmask_f
    l_ref[...] = alpha * l_ref[...] + jnp.sum(p, axis=1, keepdims=True)
    m_ref[...] = m_new

    # Positive-pair accumulators (independent of the running max).
    psum_ref[...] += jnp.sum(pmask_f * s, axis=1, keepdims=True)
    pcnt_ref[...] += jnp.sum(pmask_f, axis=1, keepdims=True)

    @pl.when(col_t == pl.num_programs(1) - 1)
    def _finalize():
        # log_prob_ij = s_ij - (m + log l);  mean over positives, then scale.
        log_denom = m_ref[...] + jnp.log(l_ref[...])
        pcnt = pcnt_ref[...]
        # NOTE: pcnt == 0 (no positives for a real anchor) yields NaN exactly
        # like the PyTorch original; padded rows are sliced off in the wrapper.
        mean_log_prob_pos = (psum_ref[...] - pcnt * log_denom) / pcnt
        loss_ref[...] = (-scale) * mean_log_prob_pos


def _supcon_loss_ref(features, labels=None, mask=None, *, temperature=0.07,
                     contrast_mode='all', base_temperature=0.07):
    """Pure-JAX reference mirroring the PyTorch module."""
    if features.ndim > 3:
        features = features.reshape(features.shape[0], features.shape[1], -1)
    bsz, n_views, dim = features.shape
    if labels is None and mask is None:
        mask = jnp.eye(bsz, dtype=jnp.float32)
    elif labels is not None:
        labels = jnp.asarray(labels).reshape(-1, 1)
        mask = (labels == labels.T).astype(jnp.float32)
    else:
        mask = mask.astype(jnp.float32)
    contrast_count = n_views
    contrast_feature = jnp.transpose(features, (1, 0, 2)).reshape(
        n_views * bsz, dim)
    if contrast_mode == 'one':
        anchor_feature = features[:, 0]
        anchor_count = 1
    elif contrast_mode == 'all':
        anchor_feature = contrast_feature
        anchor_count = contrast_count
    else:
        raise ValueError('Unknown mode: {}'.format(contrast_mode))
    s = jnp.dot(anchor_feature.astype(jnp.float32),
                contrast_feature.astype(jnp.float32).T) / temperature
    s = s - jnp.max(s, axis=1, keepdims=True)
    n_anchor = anchor_count * bsz
    n_contrast = contrast_count * bsz
    big_mask = jnp.tile(mask, (anchor_count, contrast_count))
    logits_mask = 1.0 - jnp.eye(n_anchor, n_contrast, dtype=jnp.float32)
    big_mask = big_mask * logits_mask
    exp_logits = jnp.exp(s) * logits_mask
    log_prob = s - jnp.log(jnp.sum(exp_logits, axis=1, keepdims=True))
    mean_log_prob_pos = jnp.sum(big_mask * log_prob, axis=1) / jnp.sum(
        big_mask, axis=1)
    loss = -(temperature / base_temperature) * mean_log_prob_pos
    return jnp.mean(loss)


def supcon_loss(features, labels=None, mask=None, *, temperature=0.07,
                contrast_mode='all', base_temperature=0.07):
    """JAX/Pallas equivalent of SupConLoss.forward. Returns a scalar f32."""
    if features.ndim < 3:
        raise ValueError('`features` needs to be [bsz, n_views, ...]')
    if features.ndim > 3:
        features = features.reshape(features.shape[0], features.shape[1], -1)
    bsz, n_views, dim = features.shape

    if labels is not None and mask is not None:
        raise ValueError('Cannot define both `labels` and `mask`')
    if mask is not None:
        # TODO(synk): arbitrary (possibly asymmetric) user-supplied mask has no
        # N^2-free group-id formulation; use the pure-JAX path for that branch.
        return _supcon_loss_ref(features, mask=mask, temperature=temperature,
                                contrast_mode=contrast_mode,
                                base_temperature=base_temperature)

    if labels is not None:
        labels = jnp.asarray(labels).reshape(-1)
        if labels.shape[0] != bsz:
            raise ValueError('Num of labels does not match num of features')
        base_ids = labels.astype(jnp.int32)
    else:
        base_ids = jnp.arange(bsz, dtype=jnp.int32)   # SimCLR: eye(bsz) mask

    contrast_count = n_views
    # torch.cat(torch.unbind(features, dim=1), dim=0) -> view-major stacking
    contrast_feature = jnp.transpose(features, (1, 0, 2)).reshape(
        n_views * bsz, dim)
    if contrast_mode == 'one':
        anchor_feature = features[:, 0]
        anchor_count = 1
    elif contrast_mode == 'all':
        anchor_feature = contrast_feature
        anchor_count = contrast_count
    else:
        raise ValueError('Unknown mode: {}'.format(contrast_mode))

    n_anchor = anchor_count * bsz
    n_contrast = contrast_count * bsz

    row_ids = jnp.tile(base_ids, anchor_count)     # (n_anchor,)
    col_ids = jnp.tile(base_ids, contrast_count)   # (n_contrast,)

    # Tile sizes: lane-aligned contrast tiles, sublane-aligned anchor tiles.
    tm = min(256, _round_up(n_anchor, 8))
    tc = min(512, _round_up(n_contrast, 128))
    n_a_pad = _round_up(n_anchor, tm)
    n_c_pad = _round_up(n_contrast, tc)
    d_pad = _round_up(dim, 128)

    # Zero-pad (zeros do not change the dot products; padded rows/cols are
    # excluded via validity masks / slicing).  Features keep their input dtype
    # (bf16 stays bf16 -> half the DMA bytes, f32 MXU accumulate).
    anchor_p = jnp.pad(anchor_feature,
                       ((0, n_a_pad - n_anchor), (0, d_pad - dim)))
    contrast_p = jnp.pad(contrast_feature,
                         ((0, n_c_pad - n_contrast), (0, d_pad - dim)))
    contrast_t = contrast_p.T                              # (d_pad, n_c_pad)
    row_ids_p = jnp.pad(row_ids, (0, n_a_pad - n_anchor)).reshape(n_a_pad, 1)
    col_ids_p = jnp.pad(col_ids, (0, n_c_pad - n_contrast)).reshape(1, n_c_pad)

    grid = (n_a_pad // tm, n_c_pad // tc)
    kernel = functools.partial(
        _supcon_kernel,
        inv_temp=float(1.0 / temperature),
        scale=float(temperature / base_temperature),
        tm=tm, tc=tc, n_contrast_valid=n_contrast)

    loss_per_anchor = pl.pallas_call(
        kernel,
        out_shape=jax.ShapeDtypeStruct((n_a_pad, 1), jnp.float32),
        grid_spec=pltpu.PrefetchScalarGridSpec(
            num_scalar_prefetch=0,
            grid=grid,
            in_specs=[
                pl.BlockSpec((tm, 1), lambda i, j: (i, 0)),       # row ids
                pl.BlockSpec((1, tc), lambda i, j: (0, j)),       # col ids
                pl.BlockSpec((tm, d_pad), lambda i, j: (i, 0)),   # anchors
                pl.BlockSpec((d_pad, tc), lambda i, j: (0, j)),   # contrast^T
            ],
            out_specs=pl.BlockSpec((tm, 1), lambda i, j: (i, 0)),
            scratch_shapes=[pltpu.VMEM((tm, 1), jnp.float32)] * 4,
        ),
        compiler_params=pltpu.CompilerParams(
            dimension_semantics=("parallel", "arbitrary")),
    )(row_ids_p, col_ids_p, anchor_p, contrast_t)

    # loss.view(anchor_count, batch_size).mean() == mean over all real anchors.
    return jnp.mean(loss_per_anchor[:n_anchor, 0])


if __name__ == "__main__":
    key = jax.random.PRNGKey(0)
    k1, k2, k3, k4 = jax.random.split(key, 4)

    # --- small case (matches the module's expected usage) ------------------
    bsz, n_views, dim = 8, 2, 32
    features = jax.random.normal(k1, (bsz, n_views, dim), dtype=jnp.float32)
    features = features / jnp.linalg.norm(features, axis=-1, keepdims=True)
    labels = jax.random.randint(k2, (bsz,), 0, 3)

    loss_sup = supcon_loss(features, labels=labels)
    jax.block_until_ready(loss_sup)
    ref_sup = _supcon_loss_ref(features, labels=labels)
    assert jnp.allclose(loss_sup, ref_sup, rtol=1e-4, atol=1e-4), (loss_sup, ref_sup)

    loss_unsup = supcon_loss(features)                    # SimCLR path
    jax.block_until_ready(loss_unsup)
    ref_unsup = _supcon_loss_ref(features)
    assert jnp.allclose(loss_unsup, ref_unsup, rtol=1e-4, atol=1e-4), (loss_unsup, ref_unsup)

    loss_one = supcon_loss(features, labels=labels, contrast_mode='one')
    jax.block_until_ready(loss_one)
    ref_one = _supcon_loss_ref(features, labels=labels, contrast_mode='one')
    assert jnp.allclose(loss_one, ref_one, rtol=1e-4, atol=1e-4), (loss_one, ref_one)

    # --- larger case exercising the multi-tile online reduction + padding ---
    bsz2, n_views2, dim2 = 160, 4, 48          # N = 640 -> 3 row tiles x 2 col tiles
    feats2 = jax.random.normal(k3, (bsz2, n_views2, dim2), dtype=jnp.float32)
    feats2 = feats2 / jnp.linalg.norm(feats2, axis=-1, keepdims=True)
    labels2 = jax.random.randint(k4, (bsz2,), 0, 5)
    loss_big = supcon_loss(feats2, labels=labels2)
    jax.block_until_ready(loss_big)
    ref_big = _supcon_loss_ref(feats2, labels=labels2)
    assert jnp.allclose(loss_big, ref_big, rtol=1e-4, atol=1e-4), (loss_big, ref_big)

    print("KERNEL_OK")
</pallas_src>

<mosaic_0001>
module attributes {stable_mosaic.version = 11 : i64} {
  func.func @_supcon_kernel(%arg0: i32, %arg1: i32, %arg2: memref<16x1xi32, #tpu.memory_space<vmem>>, %arg3: memref<1x128xi32, #tpu.memory_space<vmem>>, %arg4: memref<16x128xf32, #tpu.memory_space<vmem>>, %arg5: memref<128x128xf32, #tpu.memory_space<vmem>>, %arg6: memref<16x1xf32, #tpu.memory_space<vmem>>, %arg7: memref<16x1xf32, #tpu.memory_space<vmem>>, %arg8: memref<16x1xf32, #tpu.memory_space<vmem>>, %arg9: memref<16x1xf32, #tpu.memory_space<vmem>>, %arg10: memref<16x1xf32, #tpu.memory_space<vmem>>) attributes {dimension_semantics = [#tpu.dimension_semantics<parallel>, #tpu.dimension_semantics<arbitrary>], iteration_bounds = array<i64: 1, 1>, scalar_prefetch = 0 : i64, scratch_operands = 4 : i64, tpu.core_type = #tpu.core_type<tc>, window_params = [{transform_indices = @transform_0, window_bounds = array<i64: 16, 1>}, {transform_indices = @transform_1, window_bounds = array<i64: 1, 128>}, {transform_indices = @transform_2, window_bounds = array<i64: 16, 128>}, {transform_indices = @transform_3, window_bounds = array<i64: 128, 128>}, {transform_indices = @transform_4, window_bounds = array<i64: 16, 1>}]} {
    %c0_i32 = arith.constant 0 : i32
    %0 = arith.cmpi eq, %arg1, %c0_i32 : i32
    %1 = arith.extui %0 : i1 to i32
    %c0_i32_0 = arith.constant 0 : i32
    %2 = arith.cmpi ne, %1, %c0_i32_0 : i32
    scf.if %2 {
      %cst_33 = arith.constant 0xFF800000 : f32
      %63 = vector.broadcast %cst_33 : f32 to vector<16x1xf32>
      %c0_34 = arith.constant 0 : index
      %c0_35 = arith.constant 0 : index
      %64 = vector.load %arg7[%c0_34, %c0_35] : memref<16x1xf32, #tpu.memory_space<vmem>>, vector<16x1xf32>
      tpu.vector_store %arg7[%c0_34, %c0_35], %63 {strides = array<i32>} : memref<16x1xf32, #tpu.memory_space<vmem>>, vector<16x1xf32>,
      %cst_36 = arith.constant 0.000000e+00 : f32
      %65 = vector.broadcast %cst_36 : f32 to vector<16x1xf32>
      %c0_37 = arith.constant 0 : index
      %c0_38 = arith.constant 0 : index
      %66 = vector.load %arg8[%c0_37, %c0_38] : memref<16x1xf32, #tpu.memory_space<vmem>>, vector<16x1xf32>
      tpu.vector_store %arg8[%c0_37, %c0_38], %65 {strides = array<i32>} : memref<16x1xf32, #tpu.memory_space<vmem>>, vector<16x1xf32>,
      %cst_39 = arith.constant 0.000000e+00 : f32
      %67 = vector.broadcast %cst_39 : f32 to vector<16x1xf32>
      %c0_40 = arith.constant 0 : index
      %c0_41 = arith.constant 0 : index
      %68 = vector.load %arg9[%c0_40, %c0_41] : memref<16x1xf32, #tpu.memory_space<vmem>>, vector<16x1xf32>
      tpu.vector_store %arg9[%c0_40, %c0_41], %67 {strides = array<i32>} : memref<16x1xf32, #tpu.memory_space<vmem>>, vector<16x1xf32>,
      %cst_42 = arith.constant 0.000000e+00 : f32
      %69 = vector.broadcast %cst_42 : f32 to vector<16x1xf32>
      %c0_43 = arith.constant 0 : index
      %c0_44 = arith.constant 0 : index
      %70 = vector.load %arg10[%c0_43, %c0_44] : memref<16x1xf32, #tpu.memory_space<vmem>>, vector<16x1xf32>
      tpu.vector_store %arg10[%c0_43, %c0_44], %69 {strides = array<i32>} : memref<16x1xf32, #tpu.memory_space<vmem>>, vector<16x1xf32>,
    } else {
    }
    %c0 = arith.constant 0 : index
    %c0_1 = arith.constant 0 : index
    %3 = vector.load %arg4[%c0, %c0_1] : memref<16x128xf32, #tpu.memory_space<vmem>>, vector<16x128xf32>
    %c0_2 = arith.constant 0 : index
    %c0_3 = arith.constant 0 : index
    %4 = vector.load %arg5[%c0_2, %c0_3] : memref<128x128xf32, #tpu.memory_space<vmem>>, vector<128x128xf32>
    %cst = arith.constant dense<0.000000e+00> : vector<16x128xf32>
    %5 = tpu.matmul %3, %4, %cst {dimension_numbers = #tpu.dot_dimension_numbers<[1], [0], [0], [1], [0, 0, 1, 1], [], []>} : vector<16x128xf32>, vector<128x128xf32>, vector<16x128xf32> -> vector<16x128xf32>
    %cst_4 = arith.constant 14.2857141 : f32
    %6 = vector.broadcast %cst_4 : f32 to vector<16x128xf32>
    %7 = arith.mulf %5, %6 : vector<16x128xf32>
    %c16_i32 = arith.constant 16 : i32
    %8 = arith.muli %arg0, %c16_i32 : i32
    %9 = tpu.iota {dimensions = array<i32: 0>} : vector<16x128xi32>
    %10 = vector.broadcast %8 : i32 to vector<16x128xi32>
    %11 = arith.addi %10, %9 : vector<16x128xi32>
    %c128_i32 = arith.constant 128 : i32
    %12 = arith.muli %arg1, %c128_i32 : i32
    %13 = tpu.iota {dimensions = array<i32: 1>} : vector<16x128xi32>
    %14 = vector.broadcast %12 : i32 to vector<16x128xi32>
    %15 = arith.addi %14, %13 : vector<16x128xi32>
    %c16_i32_5 = arith.constant 16 : i32
    %16 = vector.broadcast %c16_i32_5 : i32 to vector<16x128xi32>
    %17 = arith.cmpi slt, %15, %16 : vector<16x128xi32>
    %18 = arith.cmpi ne, %11, %15 : vector<16x128xi32>
    %19 = arith.andi %18, %17 : vector<16x128xi1>
    %c0_6 = arith.constant 0 : index
    %c0_7 = arith.constant 0 : index
    %20 = vector.load %arg2[%c0_6, %c0_7] : memref<16x1xi32, #tpu.memory_space<vmem>>, vector<16x1xi32>
    %c0_8 = arith.constant 0 : index
    %c0_9 = arith.constant 0 : index
    %21 = vector.load %arg3[%c0_8, %c0_9] : memref<1x128xi32, #tpu.memory_space<vmem>>, vector<1x128xi32>
    %22 = vector.broadcast %20 : vector<16x1xi32> to vector<16x128xi32>
    %23 = vector.broadcast %21 : vector<1x128xi32> to vector<16x128xi32>
    %24 = arith.cmpi eq, %22, %23 : vector<16x128xi32>
    %25 = arith.andi %24, %19 : vector<16x128xi1>
    %26 = arith.extui %19 : vector<16x128xi1> to vector<16x128xi32>
    %27 = arith.sitofp %26 : vector<16x128xi32> to vector<16x128xf32>
    %28 = arith.extui %25 : vector<16x128xi1> to vector<16x128xi32>
    %29 = arith.sitofp %28 : vector<16x128xi32> to vector<16x128xf32>
    %c0_10 = arith.constant 0 : index
    %c0_11 = arith.constant 0 : index
    %30 = vector.load %arg7[%c0_10, %c0_11] : memref<16x1xf32, #tpu.memory_space<vmem>>, vector<16x1xf32>
    %cst_12 = arith.constant 0xFF800000 : f32
    %31 = vector.broadcast %cst_12 : f32 to vector<16x128xf32>
    %32 = arith.select %17, %7, %31 : vector<16x128xi1>, vector<16x128xf32>
    %cst_13 = arith.constant dense<0xFF800000> : vector<16xf32>
    %33 = vector.multi_reduction <maximumf>, %32, %cst_13 [1] : vector<16x128xf32> to vector<16xf32>
    %34 = vector.shape_cast %33 : vector<16xf32> to vector<16x1xf32>
    %35 = arith.maximumf %30, %34 : vector<16x1xf32>
    %36 = arith.subf %30, %35 : vector<16x1xf32>
    %37 = math.exp %36 : vector<16x1xf32>
    %38 = vector.broadcast %35 : vector<16x1xf32> to vector<16x128xf32>
    %39 = arith.subf %7, %38 : vector<16x128xf32>
    %40 = math.exp %39 : vector<16x128xf32>
    %41 = arith.mulf %40, %27 : vector<16x128xf32>
    %c0_14 = arith.constant 0 : index
    %c0_15 = arith.constant 0 : index
    %42 = vector.load %arg8[%c0_14, %c0_15] : memref<16x1xf32, #tpu.memory_space<vmem>>, vector<16x1xf32>
    %43 = arith.mulf %37, %42 : vector<16x1xf32>
    %cst_16 = arith.constant dense<0.000000e+00> : vector<16xf32>
    %44 = vector.multi_reduction <add>, %41, %cst_16 [1] : vector<16x128xf32> to vector<16xf32>
    %45 = vector.shape_cast %44 : vector<16xf32> to vector<16x1xf32>
    %46 = arith.addf %43, %45 : vector<16x1xf32>
    %c0_17 = arith.constant 0 : index
    %c0_18 = arith.constant 0 : index
    %47 = vector.load %arg8[%c0_17, %c0_18] : memref<16x1xf32, #tpu.memory_space<vmem>>, vector<16x1xf32>
    tpu.vector_store %arg8[%c0_17, %c0_18], %46 {strides = array<i32>} : memref<16x1xf32, #tpu.memory_space<vmem>>, vector<16x1xf32>,
    %c0_19 = arith.constant 0 : index
    %c0_20 = arith.constant 0 : index
    %48 = vector.load %arg7[%c0_19, %c0_20] : memref<16x1xf32, #tpu.memory_space<vmem>>, vector<16x1xf32>
    tpu.vector_store %arg7[%c0_19, %c0_20], %35 {strides = array<i32>} : memref<16x1xf32, #tpu.memory_space<vmem>>, vector<16x1xf32>,
    %c0_21 = arith.constant 0 : index
    %c0_22 = arith.constant 0 : index
    %49 = vector.load %arg9[%c0_21, %c0_22] : memref<16x1xf32, #tpu.memory_space<vmem>>, vector<16x1xf32>
    %50 = arith.mulf %29, %7 : vector<16x128xf32>
    %cst_23 = arith.constant dense<0.000000e+00> : vector<16xf32>
    %51 = vector.multi_reduction <add>, %50, %cst_23 [1] : vector<16x128xf32> to vector<16xf32>
    %52 = vector.shape_cast %51 : vector<16xf32> to vector<16x1xf32>
    %53 = arith.addf %49, %52 : vector<16x1xf32>
    %c0_24 = arith.constant 0 : index
    %c0_25 = arith.constant 0 : index
    %54 = vector.load %arg9[%c0_24, %c0_25] : memref<16x1xf32, #tpu.memory_space<vmem>>, vector<16x1xf32>
    tpu.vector_store %arg9[%c0_24, %c0_25], %53 {strides = array<i32>} : memref<16x1xf32, #tpu.memory_space<vmem>>, vector<16x1xf32>,
    %c0_26 = arith.constant 0 : index
    %c0_27 = arith.constant 0 : index
    %55 = vector.load %arg10[%c0_26, %c0_27] : memref<16x1xf32, #tpu.memory_space<vmem>>, vector<16x1xf32>
    %cst_28 = arith.constant dense<0.000000e+00> : vector<16xf32>
    %56 = vector.multi_reduction <add>, %29, %cst_28 [1] : vector<16x128xf32> to vector<16xf32>
    %57 = vector.shape_cast %56 : vector<16xf32> to vector<16x1xf32>
    %58 = arith.addf %55, %57 : vector<16x1xf32>
    %c0_29 = arith.constant 0 : index
    %c0_30 = arith.constant 0 : index
    %59 = vector.load %arg10[%c0_29, %c0_30] : memref<16x1xf32, #tpu.memory_space<vmem>>, vector<16x1xf32>
    tpu.vector_store %arg10[%c0_29, %c0_30], %58 {strides = array<i32>} : memref<16x1xf32, #tpu.memory_space<vmem>>, vector<16x1xf32>,
    %c0_i32_31 = arith.constant 0 : i32
    %60 = arith.cmpi eq, %arg1, %c0_i32_31 : i32
    %61 = arith.extui %60 : i1 to i32
    %c0_i32_32 = arith.constant 0 : i32
    %62 = arith.cmpi ne, %61, %c0_i32_32 : i32
    scf.if %62 {
      %c0_33 = arith.constant 0 : index
      %c0_34 = arith.constant 0 : index
      %63 = vector.load %arg7[%c0_33, %c0_34] : memref<16x1xf32, #tpu.memory_space<vmem>>, vector<16x1xf32>
      %c0_35 = arith.constant 0 : index
      %c0_36 = arith.constant 0 : index
      %64 = vector.load %arg8[%c0_35, %c0_36] : memref<16x1xf32, #tpu.memory_space<vmem>>, vector<16x1xf32>
      %65 = math.log %64 : vector<16x1xf32>
      %66 = arith.addf %63, %65 : vector<16x1xf32>
      %c0_37 = arith.constant 0 : index
      %c0_38 = arith.constant 0 : index
      %67 = vector.load %arg10[%c0_37, %c0_38] : memref<16x1xf32, #tpu.memory_space<vmem>>, vector<16x1xf32>
      %c0_39 = arith.constant 0 : index
      %c0_40 = arith.constant 0 : index
      %68 = vector.load %arg9[%c0_39, %c0_40] : memref<16x1xf32, #tpu.memory_space<vmem>>, vector<16x1xf32>
      %69 = arith.mulf %67, %66 : vector<16x1xf32>
      %70 = arith.subf %68, %69 : vector<16x1xf32>
      %71 = arith.divf %70, %67 : vector<16x1xf32>
      %cst_41 = arith.constant -1.000000e+00 : f32
      %72 = vector.broadcast %cst_41 : f32 to vector<16x1xf32>
      %73 = arith.mulf %72, %71 : vector<16x1xf32>
      %c0_42 = arith.constant 0 : index
      %c0_43 = arith.constant 0 : index
      %74 = vector.load %arg6[%c0_42, %c0_43] : memref<16x1xf32, #tpu.memory_space<vmem>>, vector<16x1xf32>
      tpu.vector_store %arg6[%c0_42, %c0_43], %73 {strides = array<i32>} : memref<16x1xf32, #tpu.memory_space<vmem>>, vector<16x1xf32>,
    } else {
    }
    return
  }
  func.func @transform_0(%arg0: i32, %arg1: i32) -> (i32, i32) {
    %c0_i32 = arith.constant 0 : i32
    %c0_i32_0 = arith.constant 0 : i32
    return %arg0, %c0_i32 : i32, i32
  }
  func.func @transform_1(%arg0: i32, %arg1: i32) -> (i32, i32) {
    %c0_i32 = arith.constant 0 : i32
    %c0_i32_0 = arith.constant 0 : i32
    return %c0_i32, %arg1 : i32, i32
  }
  func.func @transform_2(%arg0: i32, %arg1: i32) -> (i32, i32) {
    %c0_i32 = arith.constant 0 : i32
    %c0_i32_0 = arith.constant 0 : i32
    return %arg0, %c0_i32 : i32, i32
  }
  func.func @transform_3(%arg0: i32, %arg1: i32) -> (i32, i32) {
    %c0_i32 = arith.constant 0 : i32
    %c0_i32_0 = arith.constant 0 : i32
    return %c0_i32, %arg1 : i32, i32
  }
  func.func @transform_4(%arg0: i32, %arg1: i32) -> (i32, i32) {
    %c0_i32 = arith.constant 0 : i32
    %c0_i32_0 = arith.constant 0 : i32
    return %arg0, %c0_i32 : i32, i32
  }
}

</mosaic_0001>

<llo_original>
// kernel: tpu_custom_call.1
$region0: #{tpu_custom_call.1}
  #allocation0 [shape = 'u32[]', space=smem, size = 0x4, offset = 0x4, fixed_abs, tag = 'smem constant byte address 0x4 - core index']
  #allocation1 [shape = 'u32[72,128]{1,0:T(1,128)}', space=vmem, size = 0x9000, scoped, tag = 'internal scratch']
  #allocation2 [shape = 'f32[16,1]{1,0:T(8,128)}', space=vmem, size = 0x2000, scoped, tag = 'scratch operand']
  #allocation3 [shape = 'f32[16,1]{1,0:T(8,128)}', space=vmem, size = 0x2000, scoped, tag = 'scratch operand']
  #allocation4 [shape = 'f32[16,1]{1,0:T(8,128)}', space=vmem, size = 0x2000, scoped, tag = 'scratch operand']
  #allocation5 [shape = 'f32[16,1]{1,0:T(8,128)}', space=vmem, size = 0x2000, scoped, tag = 'scratch operand']
  %s0 = inlined_call_operand.vmem [shape: s32[16,1], index: 0, kind: input, shape index: {}]
  %s1 = inlined_call_operand.vmem [shape: s32[1,128], index: 1, kind: input, shape index: {}]
  %s2 = inlined_call_operand.vmem [shape: f32[16,128], index: 2, kind: input, shape index: {}]
  %s3 = inlined_call_operand.hbm [shape: f32[128,128], index: 3, kind: input, shape index: {}]
  %s4 = inlined_call_operand.vmem [shape: f32[16,1], index: 4, kind: output, shape index: {}]
  %s5 = sld [smem:[#allocation0]]
  $region38: #{tpu_custom_call.1} parent=0
    _
  %s7 = ssub.s32 1, %s5
  %s8 = scalar_select 0, %s7, %s5
  $region1: #{tpu_custom_call.1} parent=0
    #allocation6 [shape = 'u8[65536]{0}', space=vmem, size = 0x10000, scoped, tag = 'input window, operand 3, single buffered']
    #allocation7 [shape = 's32[1]{0}', space=sflag, size = 0x4, scoped, tag = 'scoped memory for tpu_custom_call.1']
    %9 = vsyncpa [#allocation7], 0
    // Predicated region
    $region2: #{tpu_custom_call.1} parent=1 // pred_check
      _
    $region3: #{tpu_custom_call.1} parent=1 // pred_check_branch
      %11 = sbr.rel (0) target = $region5
    $region4: #{tpu_custom_call.1} parent=1 // pred_region
      _
    $region5: #{tpu_custom_call.1} parent=1 // pred_fallthru
      _
    // Predicated region
    $region6: #{tpu_custom_call.1} parent=1 // pred_check
      _
    $region7: #{tpu_custom_call.1} parent=1 // pred_check_branch
      %13 = sbr.rel (0) target = $region9
    $region8: #{tpu_custom_call.1} parent=1 // pred_region
      _
    $region9: #{tpu_custom_call.1} parent=1 // pred_fallthru
      _
    // Predicated region
    $region10: #{tpu_custom_call.1} parent=1 // pred_check
      _
    $region11: #{tpu_custom_call.1} parent=1 // pred_check_branch
      %15 = sbr.rel (0) target = $region13
    $region12: #{tpu_custom_call.1} parent=1 // pred_region
      _
    $region13: #{tpu_custom_call.1} parent=1 // pred_fallthru
      _
    // Predicated region
    $region14: #{tpu_custom_call.1} parent=1 // pred_check
      _
    $region15: #{tpu_custom_call.1} parent=1 // pred_check_branch
      %17 = sbr.rel (0) target = $region17
    $region16: #{tpu_custom_call.1} parent=1 // pred_region
      %19 = vsyncadd [#allocation7], 0
      %s20 = sshll.u32 %s3, 4
      %s21 = int_to_ptr.hbm [resolvable:$true] %s20
      %s22 = sshll.u32 [#allocation6], 4
      %s23 = int_to_ptr.vmem [resolvable:$true] %s22
      %28 = dma.hbm_to_vmem [thread:$0]  %s21, 2048, %s23, [#allocation7], 128, 128, 8
    $region17: #{tpu_custom_call.1} parent=1 // pred_fallthru
      _
    // Predicated region
    $region18: #{tpu_custom_call.1} parent=1 // pred_check
      _
    $region19: #{tpu_custom_call.1} parent=1 // pred_check_branch
      %30 = sbr.rel (0) target = $region21
    $region20: #{tpu_custom_call.1} parent=1 // pred_region
      %32 = dma.done [#allocation7], 2048
    $region21: #{tpu_custom_call.1} parent=1 // pred_fallthru
      _
    %p33 = scmp.eq.s32.totalorder 0, 0
    // Predicated region
    $region22: #{tpu_custom_call.1} parent=1 // pred_check
      %p34 = pneg %p33
    $region23: #{tpu_custom_call.1} parent=1 // pred_check_branch
      %36 = sbr.rel (%p34) target = $region25
    $region24: #{tpu_custom_call.1} parent=1 // pred_region
      %vm37 = vcmask 7168
      %38 = vst.msk [vmem:[#allocation2] sm:$0xff] %vm37, -inf
      %39 = vst.msk [vmem:[#allocation2 + $0x8] sm:$0xff] %vm37, -inf
      %40 = vst.msk [vmem:[#allocation3] sm:$0xff] %vm37, 0.0
      %41 = vst.msk [vmem:[#allocation3 + $0x8] sm:$0xff] %vm37, 0.0
      %42 = vst.msk [vmem:[#allocation4] sm:$0xff] %vm37, 0.0
      %43 = vst.msk [vmem:[#allocation4 + $0x8] sm:$0xff] %vm37, 0.0
      %44 = vst.msk [vmem:[#allocation5] sm:$0xff] %vm37, 0.0
      %45 = vst.msk [vmem:[#allocation5 + $0x8] sm:$0xff] %vm37, 0.0
    $region25: #{tpu_custom_call.1} parent=1 // pred_fallthru
      _
    %v46 = vld [vmem:[%s2] sm:$0xff]
    %v47 = vld [vmem:[%s2 + $0x8] sm:$0xff]
    %v48 = vld [vmem:[#allocation6] sm:$0xff]
    %v49 = vld [vmem:[#allocation6 + $0x8] sm:$0xff]
    %v50 = vld [vmem:[#allocation6 + $0x10] sm:$0xff]
    %v51 = vld [vmem:[#allocation6 + $0x18] sm:$0xff]
    %v52 = vld [vmem:[#allocation6 + $0x20] sm:$0xff]
    %v53 = vld [vmem:[#allocation6 + $0x28] sm:$0xff]
    %v54 = vld [vmem:[#allocation6 + $0x30] sm:$0xff]
    %v55 = vld [vmem:[#allocation6 + $0x38] sm:$0xff]
    %v56 = vld [vmem:[#allocation6 + $0x40] sm:$0xff]
    %v57 = vld [vmem:[#allocation6 + $0x48] sm:$0xff]
    %v58 = vld [vmem:[#allocation6 + $0x50] sm:$0xff]
    %v59 = vld [vmem:[#allocation6 + $0x58] sm:$0xff]
    %v60 = vld [vmem:[#allocation6 + $0x60] sm:$0xff]
    %v61 = vld [vmem:[#allocation6 + $0x68] sm:$0xff]
    %v62 = vld [vmem:[#allocation6 + $0x70] sm:$0xff]
    %v63 = vld [vmem:[#allocation6 + $0x78] sm:$0xff]
    %64 = vmatpush.msra.mxu0 %v63
    %65 = vmatpush.msra.mxu0 %v62
    %66 = vmatpush.msra.mxu0 %v61
    %67 = vmatpush.msra.mxu0 %v60
    %68 = vmatpush.msra.mxu0 %v59
    %69 = vmatpush.msra.mxu0 %v58
    %70 = vmatpush.msra.mxu0 %v57
    %71 = vmatpush.msra.mxu0 %v56
    %72 = vmatpush.msra.mxu0 %v55
    %73 = vmatpush.msra.mxu0 %v54
    %74 = vmatpush.msra.mxu0 %v53
    %75 = vmatpush.msra.mxu0 %v52
    %76 = vmatpush.msra.mxu0 %v51
    %77 = vmatpush.msra.mxu0 %v50
    %78 = vmatpush.msra.mxu0 %v49
    %79 = vmatpush.msra.mxu0 %v48
    %80 = vmatmul.f32.gmra.mxu0 %v46
    %v81 = vpop.f32.mrf.mxu0
    %v82 = vadd.f32 0.0, %v81
    %83 = vmatmul.f32.gmra.mxu0 %v47
    %v84 = vpop.f32.mrf.mxu0
    %v85 = vadd.f32 0.0, %v84
    %86 = vdwg.mxu0
    %v87 = vmul.f32 %v82, 14.285714
    %v88 = vmul.f32 %v85, 14.285714
    %s89 = smul.u32 0, 16
    %v90 = vlaneseq
    %v91 = vshrl.u32 %v90, 7
    %v92 = vadd.s32 %v91, 8
    %v93 = vstv %s89
    %v94 = vadd.s32 %v93, %v91
    %v95 = vadd.s32 %v93, %v92
    %s96 = smul.u32 0, 128
    %v97 = vlaneseq
    %v98 = vand.u32 %v97, 127
    %v99 = vstv %s96
    %v100 = vadd.s32 %v99, %v98
    %vm101 = vcmp.lt.s32.totalorder %v100, 16
    %vm102 = vcmp.ne.s32.totalorder %v94, %v100
    %vm103 = vcmp.ne.s32.totalorder %v95, %v100
    %vm104 = vmand %vm102, %vm101
    %vm105 = vmand %vm103, %vm101
    %v106 = vld [vmem:[%s0] sm:$0xff]
    %v107 = vld [vmem:[%s0 + $0x8] sm:$0xff]
    %v108 = vld [vmem:[%s1] sm:$0x1]
    %109 = vset.pattern.permute.xlu0 0
    %110 = vperm.xlu0 %109, %v106
    %v111 = vpop.permute.xlu0 %110
    %112 = vset.pattern.permute.xlu0 0
    %113 = vperm.xlu0 %112, %v107
    %v114 = vpop.permute.xlu0 %113
    %v115 = vperm.slane %v108, 0
    %vm116 = vcmp.eq.s32.totalorder %v111, %v115
    %vm117 = vcmp.eq.s32.totalorder %v114, %v115
    %vm118 = vmand %vm116, %vm104
    %vm119 = vmand %vm117, %vm105
    %v120 = vsel %vm104, 1, 0
    %v121 = vsel %vm105, 1, 0
    %v122 = vcvt.s32.f32 %v120
    %v123 = vcvt.s32.f32 %v121
    %v124 = vsel %vm118, 1, 0
    %v125 = vsel %vm119, 1, 0
    %v126 = vcvt.s32.f32 %v124
    %v127 = vcvt.s32.f32 %v125
    %v128 = vld [vmem:[#allocation2] sm:$0xff]
    %v129 = vld [vmem:[#allocation2 + $0x8] sm:$0xff]
    %v130 = vsel %vm101, %v87, -inf
    %v131 = vsel %vm101, %v88, -inf
    %132 = vmax.xlane.f32.xlu0 %v130
    %v133 = vpop.xlane.xlu0 %132
    %134 = vmax.xlane.f32.xlu0 %v131
    %v135 = vpop.xlane.xlu0 %134
    %v136 = vmax.f32 %v128, %v133
    %v137 = vmax.f32 %v129, %v135
    %v138 = vsub.f32 %v128, %v136
    %v139 = vsub.f32 %v129, %v137
    %v140 = vmul.f32 %v138, 1.442695
    %v141 = vpow.pop %v140
    %v142 = vmul.f32 %v139, 1.442695
    %v143 = vpow.pop %v142
    %145 = vset.pattern.permute.xlu0 0
    %146 = vperm.xlu0 %145, %v136
    %v147 = vpop.permute.xlu0 %146
    %150 = vset.pattern.permute.xlu0 0
    %151 = vperm.xlu0 %150, %v137
    %v152 = vpop.permute.xlu0 %151
    %v154 = vsub.f32 %v87, %v147
    %v155 = vsub.f32 %v88, %v152
    %v156 = vmul.f32 %v154, 1.442695
    %v157 = vpow.pop %v156
    %v158 = vmul.f32 %v155, 1.442695
    %v159 = vpow.pop %v158
    %v160 = vmul.f32 %v157, %v122
    %v161 = vmul.f32 %v159, %v123
    %v162 = vld [vmem:[#allocation3] sm:$0xff]
    %v163 = vld [vmem:[#allocation3 + $0x8] sm:$0xff]
    %v164 = vmul.f32 %v141, %v162
    %v165 = vmul.f32 %v143, %v163
    %166 = vadd.xlane.f32.xlu0 %v160
    %v167 = vpop.xlane.xlu0 %166
    %168 = vadd.xlane.f32.xlu0 %v161
    %v169 = vpop.xlane.xlu0 %168
    %v170 = vadd.f32 %v164, %v167
    %v171 = vadd.f32 %v165, %v169
    %vm172 = vcmask 7168
    %173 = vst.msk [vmem:[#allocation3] sm:$0xff] %vm172, %v170
    %174 = vst.msk [vmem:[#allocation3 + $0x8] sm:$0xff] %vm172, %v171
    %175 = vst.msk [vmem:[#allocation2] sm:$0xff] %vm172, %v136
    %176 = vst.msk [vmem:[#allocation2 + $0x8] sm:$0xff] %vm172, %v137
    %v177 = vld [vmem:[#allocation4] sm:$0xff]
    %v178 = vld [vmem:[#allocation4 + $0x8] sm:$0xff]
    %v179 = vmul.f32 %v126, %v87
    %v180 = vmul.f32 %v127, %v88
    %181 = vadd.xlane.f32.xlu0 %v179
    %v182 = vpop.xlane.xlu0 %181
    %183 = vadd.xlane.f32.xlu0 %v180
    %v184 = vpop.xlane.xlu0 %183
    %v185 = vadd.f32 %v177, %v182
    %v186 = vadd.f32 %v178, %v184
    %187 = vst.msk [vmem:[#allocation4] sm:$0xff] %vm172, %v185
    %188 = vst.msk [vmem:[#allocation4 + $0x8] sm:$0xff] %vm172, %v186
    %v189 = vld [vmem:[#allocation5] sm:$0xff]
    %v190 = vld [vmem:[#allocation5 + $0x8] sm:$0xff]
    %191 = vadd.xlane.f32.xlu0 %v126
    %v192 = vpop.xlane.xlu0 %191
    %193 = vadd.xlane.f32.xlu0 %v127
    %v194 = vpop.xlane.xlu0 %193
    %v195 = vadd.f32 %v189, %v192
    %v196 = vadd.f32 %v190, %v194
    %197 = vst.msk [vmem:[#allocation5] sm:$0xff] %vm172, %v195
    %198 = vst.msk [vmem:[#allocation5 + $0x8] sm:$0xff] %vm172, %v196
    // Predicated region
    $region26: #{tpu_custom_call.1} parent=1 // pred_check
      %p199 = pneg %p33
    $region27: #{tpu_custom_call.1} parent=1 // pred_check_branch
      %201 = sbr.rel (%p199) target = $region29
    $region28: #{tpu_custom_call.1} parent=1 // pred_region
      %v202 = vld [vmem:[#allocation2] sm:$0xff]
      %v203 = vld [vmem:[#allocation2 + $0x8] sm:$0xff]
      %v204 = vld [vmem:[#allocation3] sm:$0xff]
      %v205 = vld [vmem:[#allocation3 + $0x8] sm:$0xff]
      %v206 = vlog2.pop %v204
      %v207 = vmul.f32 %v206, 0.6931472
      %v208 = vlog2.pop %v205
      %v209 = vmul.f32 %v208, 0.6931472
      %v210 = vadd.f32 %v202, %v207
      %v211 = vadd.f32 %v203, %v209
      %v212 = vld [vmem:[#allocation5] sm:$0xff]
      %v213 = vld [vmem:[#allocation5 + $0x8] sm:$0xff]
      %v214 = vld [vmem:[#allocation4] sm:$0xff]
      %v215 = vld [vmem:[#allocation4 + $0x8] sm:$0xff]
      %v216 = vmul.f32 %v212, %v210
      %v217 = vmul.f32 %v213, %v211
      %v218 = vsub.f32 %v214, %v216
      %v219 = vsub.f32 %v215, %v217
      %v220 = vrcp.pop %v212
      %v221 = vmul.f32 %v212, %v220
      %v222 = vsub.f32 1.0, %v221
      %v223 = vmul.f32 %v220, %v222
      %v224 = vadd.f32 %v220, %v223
      %vm225 = vweird.f32 %v212
      %vm226 = vweird.f32 %v220
      %vm227 = vmor %vm225, %vm226
      %v228 = vsel %vm227, %v220, %v224
      %v229 = vand.u32 2147483647, %v212
      %vm230 = vcmp.eq.f32.partialorder %v229, 8.507059e+37
      %v231 = vand.u32 %v212, 2147483648
      %v232 = vor.u32 1.1754944e-38, %v231
      %v233 = vsel %vm230, %v232, %v228
      %v234 = vmul.f32 %v218, %v233
      %v235 = vrcp.pop %v213
      %v236 = vmul.f32 %v213, %v235
      %v237 = vsub.f32 1.0, %v236
      %v238 = vmul.f32 %v235, %v237
      %v239 = vadd.f32 %v235, %v238
      %vm240 = vweird.f32 %v213
      %vm241 = vweird.f32 %v235
      %vm242 = vmor %vm240, %vm241
      %v243 = vsel %vm242, %v235, %v239
      %v244 = vand.u32 2147483647, %v213
      %vm245 = vcmp.eq.f32.partialorder %v244, 8.507059e+37
      %v246 = vand.u32 %v213, 2147483648
      %v247 = vor.u32 1.1754944e-38, %v246
      %v248 = vsel %vm245, %v247, %v243
      %v249 = vmul.f32 %v219, %v248
      %v250 = vmul.f32 %v234, -1.0
      %v251 = vmul.f32 %v249, -1.0
      %252 = vst.msk [vmem:[%s4] sm:$0xff] %vm172, %v250
      %253 = vst.msk [vmem:[%s4 + $0x8] sm:$0xff] %vm172, %v251
    $region29: #{tpu_custom_call.1} parent=1 // pred_fallthru
      _
    // Predicated region
    $region30: #{tpu_custom_call.1} parent=1 // pred_check
      _
    $region31: #{tpu_custom_call.1} parent=1 // pred_check_branch
      %255 = sbr.rel (0) target = $region33
    $region32: #{tpu_custom_call.1} parent=1 // pred_region
      _
    $region33: #{tpu_custom_call.1} parent=1 // pred_fallthru
      _
    // Predicated region
    $region34: #{tpu_custom_call.1} parent=1 // pred_check
      _
    $region35: #{tpu_custom_call.1} parent=1 // pred_check_branch
      %257 = sbr.rel (0) target = $region37
    $region36: #{tpu_custom_call.1} parent=1 // pred_region
      _
    $region37: #{tpu_custom_call.1} parent=1 // pred_fallthru
      _
    %258 = vsyncpa [#allocation7], 1

</llo_original>
